<compile_context>
chip_gen: v7x
topology: tpu7x:2x2x1
jax: 0.10.0
libtpu: 0.0.40
codegen_flags: <defaults>
</compile_context>

<pallas_src>
import functools
import math

import jax
import jax.numpy as jnp
import numpy as np
from jax import lax
from jax.experimental import pallas as pl
from jax.experimental.pallas import tpu as pltpu

_NEG_BIG = -1e30  # large finite negative: keeps the running max finite


def _round_up(x: int, m: int) -> int:
    return ((x + m - 1) // m) * m


def _bf16_softmax_default() -> bool:
    """bf16 VPU/EUP paths exist on v6e/v7x; on v5e and older they only add casts."""
    try:
        kind = jax.devices()[0].device_kind.lower()
    except Exception:
        return False
    return not any(t in kind for t in ("v2", "v3", "v4", "v5"))


# ---------------------------------------------------------------------------
# Kernel 1: QKV projection — runs once over the (padded) sequence.
# ---------------------------------------------------------------------------
def _qkv_projection_kernel(
    x_ref,       # [TP, d_in_p]      bf16
    wq_ref,      # [d_in_p, d_out_p] bf16  (W_query^T, padded)
    wk_ref,      # [d_in_p, d_out_p] bf16
    wv_ref,      # [d_in_p, d_out_p] bf16
    q_ref,       # [TP, d_out_p]     bf16  (pre-scaled by 1/sqrt(d_out))
    k_ref,       # [TP, d_out_p]     bf16
    v_ref,       # [TP, d_out_p]     bf16
    *,
    scale: float,
    seq_len: int,
    tile: int,
    bias_col,    # int | None
):
    x = x_ref[...]
    q = jnp.dot(x, wq_ref[...], preferred_element_type=jnp.float32) * scale
    k = jnp.dot(x, wk_ref[...], preferred_element_type=jnp.float32)
    v = jnp.dot(x, wv_ref[...], preferred_element_type=jnp.float32)

    if bias_col is not None:
        # Key padding is handled here, once per sequence row, instead of per
        # (q-tile, kv-tile) step inside the attention loop:
        #   Q[:, bias_col]           = 1
        #   K[padded rows, bias_col] = -1e30   (valid K rows keep 0 there)
        # so Q @ K^T picks up a -1e30 score for padded keys for free.
        col = lax.broadcasted_iota(jnp.int32, q.shape, 1)
        q = jnp.where(col == bias_col, 1.0, q)
        row = tile * pl.program_id(0) + lax.broadcasted_iota(jnp.int32, k.shape, 0)
        k = jnp.where((col == bias_col) & (row >= seq_len), _NEG_BIG, k)

    q_ref[...] = q.astype(q_ref.dtype)
    k_ref[...] = k.astype(k_ref.dtype)
    v_ref[...] = v.astype(v_ref.dtype)


# ---------------------------------------------------------------------------
# Kernel 2: flash attention over precomputed Q/K/V (online softmax).
# ---------------------------------------------------------------------------
def _flash_attention_kernel(
    q_ref,      # [TQ, d_out_p]  bf16  (scaled Q)
    k_ref,      # [TK, d_out_p]  bf16
    v_ref,      # [TK, d_out_p]  bf16
    o_ref,      # [TQ, d_out_p]  bf16
    m_sc,       # [TQ, 1] f32  running max
    l_sc,       # [TQ, 1] f32  running denominator
    acc_sc,     # [TQ, d_out_p] f32  running numerator
    *,
    softmax_bf16: bool,
):
    ki = pl.program_id(1)

    @pl.when(ki == 0)
    def _init():
        m_sc[...] = jnp.full_like(m_sc, -jnp.inf)
        l_sc[...] = jnp.zeros_like(l_sc)
        acc_sc[...] = jnp.zeros_like(acc_sc)

    # scores = Q @ K^T, contracting both operands on their last dim (no explicit
    # transpose / XLU shuffle); bf16 MXU inputs, f32 accumulation.
    s = lax.dot_general(
        q_ref[...], k_ref[...],
        dimension_numbers=(((1,), (1,)), ((), ())),
        preferred_element_type=jnp.float32)

    m_prev = m_sc[...]
    m_new = jnp.maximum(m_prev, jnp.max(s, axis=-1, keepdims=True))
    alpha = jnp.exp(m_prev - m_new)

    if softmax_bf16:
        # v6e / v7x: bf16 exp + bf16 p tile (~2x elementwise throughput, half
        # the vreg pressure); m / l / acc stay in f32.
        p = jnp.exp((s - m_new).astype(jnp.bfloat16))
        l_sc[...] = alpha * l_sc[...] + jnp.sum(
            p, axis=-1, keepdims=True, dtype=jnp.float32)
    else:
        # v5e and older: no bf16 VPU/EUP path — keep the softmax math in f32.
        p32 = jnp.exp(s - m_new)
        l_sc[...] = alpha * l_sc[...] + jnp.sum(p32, axis=-1, keepdims=True)
        p = p32.astype(jnp.bfloat16)

    acc_sc[...] = alpha * acc_sc[...] + jnp.dot(
        p, v_ref[...], preferred_element_type=jnp.float32)
    m_sc[...] = m_new

    @pl.when(ki == pl.num_programs(1) - 1)
    def _finalize():
        inv_l = pl.reciprocal(l_sc[...], approx=True)   # EUP slot, ~free
        o_ref[...] = (acc_sc[...] * inv_l).astype(o_ref.dtype)


# ---------------------------------------------------------------------------
# Wrapper
# ---------------------------------------------------------------------------
def self_attention_v2(x, w_query, w_key, w_value, *, tq=256, tk=256,
                      softmax_bf16=None):
    """Forward pass of SelfAttention_v2.

    x    : [S, d_in]      float32
    w_*  : [d_out, d_in]  (PyTorch nn.Linear weight layout)
    returns [S, d_out] in x.dtype
    """
    S, d_in = x.shape
    d_out = w_query.shape[0]
    assert tq % 16 == 0 and tk % 16 == 0
    if softmax_bf16 is None:
        softmax_bf16 = _bf16_softmax_default()

    # ---- tile / padding selection ------------------------------------------
    # Clamp tiles for short sequences (16-row alignment covers bf16 sublane
    # packing); pad the sequence to a common multiple of both tiles.
    s16 = _round_up(S, 16)
    tq_e = min(tq, s16)
    tk_e = min(tk, s16)
    s_pad = _round_up(S, math.lcm(tq_e, tk_e))

    # v7x megacore: the q axis is the "parallel" one; keep >= 2 q tiles when the
    # padded sequence allows it so the second TensorCore isn't idle.
    while tq_e > 128 and s_pad // tq_e < 2 and (tq_e // 2) % 16 == 0:
        tq_e //= 2

    # Lane-dense feature padding (full vst stores, properly fed MXU).
    d_in_p = _round_up(d_in, 128)
    d_out_p = _round_up(d_out, 128)

    # Reserve one spare "bias" column for key-padding (see projection kernel)
    # only if the sequence actually needs padding.
    bias_col = None
    if s_pad != S:
        if d_out_p == d_out:
            d_out_p += 128
        bias_col = d_out

    # ---- operand prep (zero padding is exact for the projections) -----------
    x_bf = jnp.zeros((s_pad, d_in_p), jnp.bfloat16)
    x_bf = x_bf.at[:S, :d_in].set(x.astype(jnp.bfloat16))

    def prep_w(w):
        # Pre-transpose nn.Linear weight (y = x @ W.T), pad, cast to bf16.
        wp = jnp.zeros((d_in_p, d_out_p), jnp.bfloat16)
        return wp.at[:d_in, :d_out].set(w.T.astype(jnp.bfloat16))

    wq_p, wk_p, wv_p = prep_w(w_query), prep_w(w_key), prep_w(w_value)

    scale = 1.0 / float(d_out) ** 0.5   # keys.shape[-1] == d_out in the reference

    # ---- kernel 1: project (scaled) Q, K, V once over the sequence ----------
    tp = tk_e                            # projection tile rows (divides s_pad)
    proj_kernel = functools.partial(
        _qkv_projection_kernel, scale=scale, seq_len=S, tile=tp,
        bias_col=bias_col)
    qkv_out_shape = [jax.ShapeDtypeStruct((s_pad, d_out_p), jnp.bfloat16)] * 3
    qkv_spec = pl.BlockSpec((tp, d_out_p), lambda i: (i, 0))

    def _project(single_buffer_weights: bool):
        if single_buffer_weights:
            # Constant block index -> single-buffer the weights so they are not
            # duplicated in VMEM (matters at production d_in/d_out on v7x).
            def w_spec():
                return pl.BlockSpec((d_in_p, d_out_p), lambda i: (0, 0),
                                    pipeline_mode=pl.Buffered(1))
        else:
            def w_spec():
                return pl.BlockSpec((d_in_p, d_out_p), lambda i: (0, 0))
        return pl.pallas_call(
            proj_kernel,
            out_shape=qkv_out_shape,
            grid_spec=pltpu.PrefetchScalarGridSpec(
                num_scalar_prefetch=0,
                grid=(s_pad // tp,),
                in_specs=[
                    pl.BlockSpec((tp, d_in_p), lambda i: (i, 0)),   # x rows
                    w_spec(), w_spec(), w_spec(),                   # Wq^T, Wk^T, Wv^T
                ],
                out_specs=[qkv_spec, qkv_spec, qkv_spec],
            ),
            compiler_params=pltpu.CompilerParams(
                dimension_semantics=("parallel",)),
        )(x_bf, wq_p, wk_p, wv_p)

    try:
        q_bf, k_bf, v_bf = _project(single_buffer_weights=True)
    except Exception:
        # Fallback for jax builds without BlockSpec.pipeline_mode plumbing.
        q_bf, k_bf, v_bf = _project(single_buffer_weights=False)

    # ---- kernel 2: flash attention over precomputed Q/K/V -------------------
    flash_kernel = functools.partial(
        _flash_attention_kernel, softmax_bf16=softmax_bf16)

    out_padded = pl.pallas_call(
        flash_kernel,
        # bf16 output: halves HBM writeback; accumulation stays f32.
        out_shape=jax.ShapeDtypeStruct((s_pad, d_out_p), jnp.bfloat16),
        grid_spec=pltpu.PrefetchScalarGridSpec(
            num_scalar_prefetch=0,
            grid=(s_pad // tq_e, s_pad // tk_e),
            in_specs=[
                pl.BlockSpec((tq_e, d_out_p), lambda qi, ki: (qi, 0)),  # Q
                pl.BlockSpec((tk_e, d_out_p), lambda qi, ki: (ki, 0)),  # K
                pl.BlockSpec((tk_e, d_out_p), lambda qi, ki: (ki, 0)),  # V
            ],
            out_specs=pl.BlockSpec((tq_e, d_out_p), lambda qi, ki: (qi, 0)),
            scratch_shapes=[
                pltpu.VMEM((tq_e, 1), jnp.float32),        # running max m
                pltpu.VMEM((tq_e, 1), jnp.float32),        # running denom l
                pltpu.VMEM((tq_e, d_out_p), jnp.float32),  # running numerator
            ],
        ),
        compiler_params=pltpu.CompilerParams(
            dimension_semantics=("parallel", "arbitrary")),
    )(q_bf, k_bf, v_bf)

    return out_padded[:S, :d_out].astype(x.dtype)


def self_attention_v2_ref(x, w_query, w_key, w_value):
    """Pure-JAX reference mirroring the PyTorch forward exactly (f32)."""
    q = x @ w_query.T
    k = x @ w_key.T
    v = x @ w_value.T
    scores = q @ k.T
    weights = jax.nn.softmax(scores / (k.shape[-1] ** 0.5), axis=-1)
    return weights @ v


if __name__ == "__main__":
    # ---- Test 1: the exact shapes/inputs implied by the module (S=6, d_in=3, d_out=2).
    x_small = jnp.array(
        [[0.43, 0.15, 0.89],
         [0.55, 0.87, 0.66],
         [0.57, 0.85, 0.64],
         [0.22, 0.58, 0.33],
         [0.77, 0.25, 0.10],
         [0.05, 0.80, 0.55]], dtype=jnp.float32)
    d_in, d_out = 3, 2

    key = jax.random.PRNGKey(0)
    kq, kk, kv, kx2, kq2, kk2, kv2 = jax.random.split(key, 7)

    # nn.Linear(d_in, d_out, bias=False) weights: [d_out, d_in], U(-1/sqrt(d_in), 1/sqrt(d_in)).
    bound = 1.0 / np.sqrt(d_in)
    w_query = jax.random.uniform(kq, (d_out, d_in), jnp.float32, -bound, bound)
    w_key = jax.random.uniform(kk, (d_out, d_in), jnp.float32, -bound, bound)
    w_value = jax.random.uniform(kv, (d_out, d_in), jnp.float32, -bound, bound)

    out = jax.block_until_ready(self_attention_v2(x_small, w_query, w_key, w_value))
    ref = self_attention_v2_ref(x_small, w_query, w_key, w_value)
    np.testing.assert_allclose(np.asarray(out, np.float32),
                               np.asarray(ref, np.float32), rtol=2e-2, atol=2e-2)

    # ---- Test 2: multi-tile grid (2 q-tiles x 2 kv-tiles at tq=tk=256): online
    # softmax across kv steps, key-padding bias column, >= 2 parallel q tiles.
    S2, d_in2, d_out2 = 300, 64, 64
    x2 = jax.random.uniform(kx2, (S2, d_in2), dtype=jnp.float32)
    b2 = 1.0 / np.sqrt(d_in2)
    wq2 = jax.random.uniform(kq2, (d_out2, d_in2), jnp.float32, -b2, b2)
    wk2 = jax.random.uniform(kk2, (d_out2, d_in2), jnp.float32, -b2, b2)
    wv2 = jax.random.uniform(kv2, (d_out2, d_in2), jnp.float32, -b2, b2)

    out2 = jax.block_until_ready(self_attention_v2(x2, wq2, wk2, wv2))
    # Reference on bf16-rounded inputs (matches the kernel's input quantization).
    bf = lambda a: a.astype(jnp.bfloat16).astype(jnp.float32)
    ref2 = self_attention_v2_ref(bf(x2), bf(wq2), bf(wk2), bf(wv2))
    np.testing.assert_allclose(np.asarray(out2, np.float32),
                               np.asarray(ref2, np.float32), rtol=2e-2, atol=2e-2)

    print("KERNEL_OK")
</pallas_src>

<mosaic_0001>
module attributes {stable_mosaic.version = 11 : i64} {
  func.func @_qkv_projection_kernel(%arg0: i32, %arg1: memref<16x128xbf16, #tpu.memory_space<vmem>>, %arg2: memref<128x128xbf16, #tpu.memory_space<vmem>>, %arg3: memref<128x128xbf16, #tpu.memory_space<vmem>>, %arg4: memref<128x128xbf16, #tpu.memory_space<vmem>>, %arg5: memref<16x128xbf16, #tpu.memory_space<vmem>>, %arg6: memref<16x128xbf16, #tpu.memory_space<vmem>>, %arg7: memref<16x128xbf16, #tpu.memory_space<vmem>>) attributes {dimension_semantics = [#tpu.dimension_semantics<parallel>], iteration_bounds = array<i64: 1>, scalar_prefetch = 0 : i64, scratch_operands = 0 : i64, tpu.core_type = #tpu.core_type<tc>, window_params = [{transform_indices = @transform_0, window_bounds = array<i64: 16, 128>}, {pipeline_mode = #tpu.pipeline_mode<synchronous>, transform_indices = @transform_1, window_bounds = array<i64: 128, 128>}, {pipeline_mode = #tpu.pipeline_mode<synchronous>, transform_indices = @transform_2, window_bounds = array<i64: 128, 128>}, {pipeline_mode = #tpu.pipeline_mode<synchronous>, transform_indices = @transform_3, window_bounds = array<i64: 128, 128>}, {transform_indices = @transform_4, window_bounds = array<i64: 16, 128>}, {transform_indices = @transform_5, window_bounds = array<i64: 16, 128>}, {transform_indices = @transform_6, window_bounds = array<i64: 16, 128>}]} {
    %c0 = arith.constant 0 : index
    %c0_0 = arith.constant 0 : index
    %0 = vector.load %arg1[%c0, %c0_0] : memref<16x128xbf16, #tpu.memory_space<vmem>>, vector<16x128xbf16>
    %c0_1 = arith.constant 0 : index
    %c0_2 = arith.constant 0 : index
    %1 = vector.load %arg2[%c0_1, %c0_2] : memref<128x128xbf16, #tpu.memory_space<vmem>>, vector<128x128xbf16>
    %cst = arith.constant dense<0.000000e+00> : vector<16x128xf32>
    %2 = tpu.matmul %0, %1, %cst {dimension_numbers = #tpu.dot_dimension_numbers<[1], [0], [0], [1], [0, 0, 1, 1], [], []>} : vector<16x128xbf16>, vector<128x128xbf16>, vector<16x128xf32> -> vector<16x128xf32>
    %cst_3 = arith.constant 0.707106769 : f32
    %3 = vector.broadcast %cst_3 : f32 to vector<16x128xf32>
    %4 = arith.mulf %2, %3 : vector<16x128xf32>
    %c0_4 = arith.constant 0 : index
    %c0_5 = arith.constant 0 : index
    %5 = vector.load %arg3[%c0_4, %c0_5] : memref<128x128xbf16, #tpu.memory_space<vmem>>, vector<128x128xbf16>
    %cst_6 = arith.constant dense<0.000000e+00> : vector<16x128xf32>
    %6 = tpu.matmul %0, %5, %cst_6 {dimension_numbers = #tpu.dot_dimension_numbers<[1], [0], [0], [1], [0, 0, 1, 1], [], []>} : vector<16x128xbf16>, vector<128x128xbf16>, vector<16x128xf32> -> vector<16x128xf32>
    %c0_7 = arith.constant 0 : index
    %c0_8 = arith.constant 0 : index
    %7 = vector.load %arg4[%c0_7, %c0_8] : memref<128x128xbf16, #tpu.memory_space<vmem>>, vector<128x128xbf16>
    %cst_9 = arith.constant dense<0.000000e+00> : vector<16x128xf32>
    %8 = tpu.matmul %0, %7, %cst_9 {dimension_numbers = #tpu.dot_dimension_numbers<[1], [0], [0], [1], [0, 0, 1, 1], [], []>} : vector<16x128xbf16>, vector<128x128xbf16>, vector<16x128xf32> -> vector<16x128xf32>
    %9 = tpu.iota {dimensions = array<i32: 1>} : vector<16x128xi32>
    %c2_i32 = arith.constant 2 : i32
    %10 = vector.broadcast %c2_i32 : i32 to vector<16x128xi32>
    %11 = arith.cmpi eq, %9, %10 : vector<16x128xi32>
    %cst_10 = arith.constant 1.000000e+00 : f32
    %12 = vector.broadcast %cst_10 : f32 to vector<16x128xf32>
    %13 = arith.select %11, %12, %4 : vector<16x128xi1>, vector<16x128xf32>
    %c16_i32 = arith.constant 16 : i32
    %14 = arith.muli %c16_i32, %arg0 : i32
    %15 = tpu.iota {dimensions = array<i32: 0>} : vector<16x128xi32>
    %16 = vector.broadcast %14 : i32 to vector<16x128xi32>
    %17 = arith.addi %16, %15 : vector<16x128xi32>
    %c2_i32_11 = arith.constant 2 : i32
    %18 = vector.broadcast %c2_i32_11 : i32 to vector<16x128xi32>
    %19 = arith.cmpi eq, %9, %18 : vector<16x128xi32>
    %c6_i32 = arith.constant 6 : i32
    %20 = vector.broadcast %c6_i32 : i32 to vector<16x128xi32>
    %21 = arith.cmpi sge, %17, %20 : vector<16x128xi32>
    %22 = arith.andi %19, %21 : vector<16x128xi1>
    %cst_12 = arith.constant -1.000000e+30 : f32
    %23 = vector.broadcast %cst_12 : f32 to vector<16x128xf32>
    %24 = arith.select %22, %23, %6 : vector<16x128xi1>, vector<16x128xf32>
    %25 = arith.truncf %13 : vector<16x128xf32> to vector<16x128xbf16>
    %c0_13 = arith.constant 0 : index
    %c0_14 = arith.constant 0 : index
    %26 = vector.load %arg5[%c0_13, %c0_14] : memref<16x128xbf16, #tpu.memory_space<vmem>>, vector<16x128xbf16>
    tpu.vector_store %arg5[%c0_13, %c0_14], %25 {strides = array<i32>} : memref<16x128xbf16, #tpu.memory_space<vmem>>, vector<16x128xbf16>,
    %27 = arith.truncf %24 : vector<16x128xf32> to vector<16x128xbf16>
    %c0_15 = arith.constant 0 : index
    %c0_16 = arith.constant 0 : index
    %28 = vector.load %arg6[%c0_15, %c0_16] : memref<16x128xbf16, #tpu.memory_space<vmem>>, vector<16x128xbf16>
    tpu.vector_store %arg6[%c0_15, %c0_16], %27 {strides = array<i32>} : memref<16x128xbf16, #tpu.memory_space<vmem>>, vector<16x128xbf16>,
    %29 = arith.truncf %8 : vector<16x128xf32> to vector<16x128xbf16>
    %c0_17 = arith.constant 0 : index
    %c0_18 = arith.constant 0 : index
    %30 = vector.load %arg7[%c0_17, %c0_18] : memref<16x128xbf16, #tpu.memory_space<vmem>>, vector<16x128xbf16>
    tpu.vector_store %arg7[%c0_17, %c0_18], %29 {strides = array<i32>} : memref<16x128xbf16, #tpu.memory_space<vmem>>, vector<16x128xbf16>,
    return
  }
  func.func @transform_0(%arg0: i32) -> (i32, i32) {
    %c0_i32 = arith.constant 0 : i32
    %c0_i32_0 = arith.constant 0 : i32
    return %arg0, %c0_i32 : i32, i32
  }
  func.func @transform_1(%arg0: i32) -> (i32, i32) {
    %c0_i32 = arith.constant 0 : i32
    %c0_i32_0 = arith.constant 0 : i32
    %c0_i32_1 = arith.constant 0 : i32
    return %c0_i32, %c0_i32_0 : i32, i32
  }
  func.func @transform_2(%arg0: i32) -> (i32, i32) {
    %c0_i32 = arith.constant 0 : i32
    %c0_i32_0 = arith.constant 0 : i32
    %c0_i32_1 = arith.constant 0 : i32
    return %c0_i32, %c0_i32_0 : i32, i32
  }
  func.func @transform_3(%arg0: i32) -> (i32, i32) {
    %c0_i32 = arith.constant 0 : i32
    %c0_i32_0 = arith.constant 0 : i32
    %c0_i32_1 = arith.constant 0 : i32
    return %c0_i32, %c0_i32_0 : i32, i32
  }
  func.func @transform_4(%arg0: i32) -> (i32, i32) {
    %c0_i32 = arith.constant 0 : i32
    %c0_i32_0 = arith.constant 0 : i32
    return %arg0, %c0_i32 : i32, i32
  }
  func.func @transform_5(%arg0: i32) -> (i32, i32) {
    %c0_i32 = arith.constant 0 : i32
    %c0_i32_0 = arith.constant 0 : i32
    return %arg0, %c0_i32 : i32, i32
  }
  func.func @transform_6(%arg0: i32) -> (i32, i32) {
    %c0_i32 = arith.constant 0 : i32
    %c0_i32_0 = arith.constant 0 : i32
    return %arg0, %c0_i32 : i32, i32
  }
}

module attributes {stable_mosaic.version = 11 : i64} {
  func.func @_qkv_projection_kernel(%arg0: i32, %arg1: memref<16x128xbf16, #tpu.memory_space<vmem>>, %arg2: memref<128x128xbf16, #tpu.memory_space<vmem>>, %arg3: memref<128x128xbf16, #tpu.memory_space<vmem>>, %arg4: memref<128x128xbf16, #tpu.memory_space<vmem>>, %arg5: memref<16x128xbf16, #tpu.memory_space<vmem>>, %arg6: memref<16x128xbf16, #tpu.memory_space<vmem>>, %arg7: memref<16x128xbf16, #tpu.memory_space<vmem>>) attributes {dimension_semantics = [#tpu.dimension_semantics<parallel>], iteration_bounds = array<i64: 1>, scalar_prefetch = 0 : i64, scratch_operands = 0 : i64, tpu.core_type = #tpu.core_type<tc>, window_params = [{transform_indices = @transform_0, window_bounds = array<i64: 16, 128>}, {pipeline_mode = #tpu.pipeline_mode<synchronous>, transform_indices = @transform_1, window_bounds = array<i64: 128, 128>}, {pipeline_mode = #tpu.pipeline_mode<synchronous>, transform_indices = @transform_2, window_bounds = array<i64: 128, 128>}, {pipeline_mode = #tpu.pipeline_mode<synchronous>, transform_indices = @transform_3, window_bounds = array<i64: 128, 128>}, {transform_indices = @transform_4, window_bounds = array<i64: 16, 128>}, {transform_indices = @transform_5, window_bounds = array<i64: 16, 128>}, {transform_indices = @transform_6, window_bounds = array<i64: 16, 128>}]} {
    %c0 = arith.constant 0 : index
    %c0_0 = arith.constant 0 : index
    %0 = vector.load %arg1[%c0, %c0_0] : memref<16x128xbf16, #tpu.memory_space<vmem>>, vector<16x128xbf16>
    %c0_1 = arith.constant 0 : index
    %c0_2 = arith.constant 0 : index
    %1 = vector.load %arg2[%c0_1, %c0_2] : memref<128x128xbf16, #tpu.memory_space<vmem>>, vector<128x128xbf16>
    %cst = arith.constant dense<0.000000e+00> : vector<16x128xf32>
    %2 = tpu.matmul %0, %1, %cst {dimension_numbers = #tpu.dot_dimension_numbers<[1], [0], [0], [1], [0, 0, 1, 1], [], []>} : vector<16x128xbf16>, vector<128x128xbf16>, vector<16x128xf32> -> vector<16x128xf32>
    %cst_3 = arith.constant 0.707106769 : f32
    %3 = vector.broadcast %cst_3 : f32 to vector<16x128xf32>
    %4 = arith.mulf %2, %3 : vector<16x128xf32>
    %c0_4 = arith.constant 0 : index
    %c0_5 = arith.constant 0 : index
    %5 = vector.load %arg3[%c0_4, %c0_5] : memref<128x128xbf16, #tpu.memory_space<vmem>>, vector<128x128xbf16>
    %cst_6 = arith.constant dense<0.000000e+00> : vector<16x128xf32>
    %6 = tpu.matmul %0, %5, %cst_6 {dimension_numbers = #tpu.dot_dimension_numbers<[1], [0], [0], [1], [0, 0, 1, 1], [], []>} : vector<16x128xbf16>, vector<128x128xbf16>, vector<16x128xf32> -> vector<16x128xf32>
    %c0_7 = arith.constant 0 : index
    %c0_8 = arith.constant 0 : index
    %7 = vector.load %arg4[%c0_7, %c0_8] : memref<128x128xbf16, #tpu.memory_space<vmem>>, vector<128x128xbf16>
    %cst_9 = arith.constant dense<0.000000e+00> : vector<16x128xf32>
    %8 = tpu.matmul %0, %7, %cst_9 {dimension_numbers = #tpu.dot_dimension_numbers<[1], [0], [0], [1], [0, 0, 1, 1], [], []>} : vector<16x128xbf16>, vector<128x128xbf16>, vector<16x128xf32> -> vector<16x128xf32>
    %9 = tpu.iota {dimensions = array<i32: 1>} : vector<16x128xi32>
    %c2_i32 = arith.constant 2 : i32
    %10 = vector.broadcast %c2_i32 : i32 to vector<16x128xi32>
    %11 = arith.cmpi eq, %9, %10 : vector<16x128xi32>
    %cst_10 = arith.constant 1.000000e+00 : f32
    %12 = vector.broadcast %cst_10 : f32 to vector<16x128xf32>
    %13 = arith.select %11, %12, %4 : vector<16x128xi1>, vector<16x128xf32>
    %c16_i32 = arith.constant 16 : i32
    %14 = arith.muli %c16_i32, %arg0 : i32
    %15 = tpu.iota {dimensions = array<i32: 0>} : vector<16x128xi32>
    %16 = vector.broadcast %14 : i32 to vector<16x128xi32>
    %17 = arith.addi %16, %15 : vector<16x128xi32>
    %c2_i32_11 = arith.constant 2 : i32
    %18 = vector.broadcast %c2_i32_11 : i32 to vector<16x128xi32>
    %19 = arith.cmpi eq, %9, %18 : vector<16x128xi32>
    %c6_i32 = arith.constant 6 : i32
    %20 = vector.broadcast %c6_i32 : i32 to vector<16x128xi32>
    %21 = arith.cmpi sge, %17, %20 : vector<16x128xi32>
    %22 = arith.andi %19, %21 : vector<16x128xi1>
    %cst_12 = arith.constant -1.000000e+30 : f32
    %23 = vector.broadcast %cst_12 : f32 to vector<16x128xf32>
    %24 = arith.select %22, %23, %6 : vector<16x128xi1>, vector<16x128xf32>
    %25 = arith.truncf %13 : vector<16x128xf32> to vector<16x128xbf16>
    %c0_13 = arith.constant 0 : index
    %c0_14 = arith.constant 0 : index
    %26 = vector.load %arg5[%c0_13, %c0_14] : memref<16x128xbf16, #tpu.memory_space<vmem>>, vector<16x128xbf16>
    tpu.vector_store %arg5[%c0_13, %c0_14], %25 {strides = array<i32>} : memref<16x128xbf16, #tpu.memory_space<vmem>>, vector<16x128xbf16>,
    %27 = arith.truncf %24 : vector<16x128xf32> to vector<16x128xbf16>
    %c0_15 = arith.constant 0 : index
    %c0_16 = arith.constant 0 : index
    %28 = vector.load %arg6[%c0_15, %c0_16] : memref<16x128xbf16, #tpu.memory_space<vmem>>, vector<16x128xbf16>
    tpu.vector_store %arg6[%c0_15, %c0_16], %27 {strides = array<i32>} : memref<16x128xbf16, #tpu.memory_space<vmem>>, vector<16x128xbf16>,
    %29 = arith.truncf %8 : vector<16x128xf32> to vector<16x128xbf16>
    %c0_17 = arith.constant 0 : index
    %c0_18 = arith.constant 0 : index
    %30 = vector.load %arg7[%c0_17, %c0_18] : memref<16x128xbf16, #tpu.memory_space<vmem>>, vector<16x128xbf16>
    tpu.vector_store %arg7[%c0_17, %c0_18], %29 {strides = array<i32>} : memref<16x128xbf16, #tpu.memory_space<vmem>>, vector<16x128xbf16>,
    return
  }
  func.func @transform_0(%arg0: i32) -> (i32, i32) {
    %c0_i32 = arith.constant 0 : i32
    %c0_i32_0 = arith.constant 0 : i32
    return %arg0, %c0_i32 : i32, i32
  }
  func.func @transform_1(%arg0: i32) -> (i32, i32) {
    %c0_i32 = arith.constant 0 : i32
    %c0_i32_0 = arith.constant 0 : i32
    %c0_i32_1 = arith.constant 0 : i32
    return %c0_i32, %c0_i32_0 : i32, i32
  }
  func.func @transform_2(%arg0: i32) -> (i32, i32) {
    %c0_i32 = arith.constant 0 : i32
    %c0_i32_0 = arith.constant 0 : i32
    %c0_i32_1 = arith.constant 0 : i32
    return %c0_i32, %c0_i32_0 : i32, i32
  }
  func.func @transform_3(%arg0: i32) -> (i32, i32) {
    %c0_i32 = arith.constant 0 : i32
    %c0_i32_0 = arith.constant 0 : i32
    %c0_i32_1 = arith.constant 0 : i32
    return %c0_i32, %c0_i32_0 : i32, i32
  }
  func.func @transform_4(%arg0: i32) -> (i32, i32) {
    %c0_i32 = arith.constant 0 : i32
    %c0_i32_0 = arith.constant 0 : i32
    return %arg0, %c0_i32 : i32, i32
  }
  func.func @transform_5(%arg0: i32) -> (i32, i32) {
    %c0_i32 = arith.constant 0 : i32
    %c0_i32_0 = arith.constant 0 : i32
    return %arg0, %c0_i32 : i32, i32
  }
  func.func @transform_6(%arg0: i32) -> (i32, i32) {
    %c0_i32 = arith.constant 0 : i32
    %c0_i32_0 = arith.constant 0 : i32
    return %arg0, %c0_i32 : i32, i32
  }
}

</mosaic_0001>

<llo_original>
// kernel: tpu_custom_call.1
$region0: #{tpu_custom_call.1}
  #allocation0 [shape = 'u32[]', space=smem, size = 0x4, offset = 0x4, fixed_abs, tag = 'smem constant byte address 0x4 - core index']
  #allocation1 [shape = 'u32[144,128]{1,0:T(1,128)}', space=vmem, size = 0x12000, scoped, tag = 'internal scratch']
  %s0 = inlined_call_operand.hbm [shape: bf16[16,128], index: 0, kind: input, shape index: {}]
  %s1 = inlined_call_operand.hbm [shape: bf16[128,128], index: 1, kind: input, shape index: {}]
  %s2 = inlined_call_operand.hbm [shape: bf16[128,128], index: 2, kind: input, shape index: {}]
  %s3 = inlined_call_operand.hbm [shape: bf16[128,128], index: 3, kind: input, shape index: {}]
  %s4 = inlined_call_operand.hbm [shape: bf16[16,128], index: 4, kind: output, shape index: {0}]
  %s5 = inlined_call_operand.hbm [shape: bf16[16,128], index: 5, kind: output, shape index: {1}]
  %s6 = inlined_call_operand.hbm [shape: bf16[16,128], index: 6, kind: output, shape index: {2}]
  %7 = xla_tuple %s4, %s5, %s6
  %s8 = sld [smem:[#allocation0]]
  $region58: #{tpu_custom_call.1} parent=0
    _
  %s10 = ssub.s32 1, %s8
  %s11 = scalar_select 0, %s10, %s8
  $region1: #{tpu_custom_call.1} parent=0
    #allocation2 [shape = 'u8[4096]{0}', space=vmem, size = 0x1000, scoped, tag = 'input window, operand 0, single buffered']
    #allocation3 [shape = 's32[1]{0}', space=sflag, size = 0x4, scoped, tag = 'scoped memory for tpu_custom_call.1']
    #allocation4 [shape = 's32[1]{0}', space=sflag, size = 0x4, scoped, tag = 'scoped memory for tpu_custom_call.1']
    #allocation5 [shape = 'u8[32768]{0}', space=vmem, size = 0x8000, scoped, tag = 'input window, operand 1, single buffered']
    #allocation6 [shape = 's32[1]{0}', space=sflag, size = 0x4, scoped, tag = 'scoped memory for tpu_custom_call.1']
    #allocation7 [shape = 'u8[32768]{0}', space=vmem, size = 0x8000, scoped, tag = 'input window, operand 2, single buffered']
    #allocation8 [shape = 'u8[32768]{0}', space=vmem, size = 0x8000, scoped, tag = 'input window, operand 3, single buffered']
    #allocation9 [shape = 's32[1]{0}', space=sflag, size = 0x4, scoped, tag = 'scoped memory for tpu_custom_call.1']
    #allocation10 [shape = 'u8[4096]{0}', space=vmem, size = 0x1000, scoped, tag = 'output window, operand 0, single buffered']
    #allocation11 [shape = 'u8[4096]{0}', space=vmem, size = 0x1000, scoped, tag = 'output window, operand 1, single buffered']
    #allocation12 [shape = 's32[1]{0}', space=sflag, size = 0x4, scoped, tag = 'scoped memory for tpu_custom_call.1']
    #allocation13 [shape = 'u8[4096]{0}', space=vmem, size = 0x1000, scoped, tag = 'output window, operand 2, single buffered']
    %12 = vsyncpa [#allocation3], 0
    %13 = vsyncpa [#allocation6], 0
    %14 = vsyncpa [#allocation9], 0
    %15 = vsyncpa [#allocation4], 0
    %16 = vsyncpa [#allocation12], 0
    // Predicated region
    $region2: #{tpu_custom_call.1} parent=1 // pred_check
      _
    $region3: #{tpu_custom_call.1} parent=1 // pred_check_branch
      %18 = sbr.rel (0) target = $region5
    $region4: #{tpu_custom_call.1} parent=1 // pred_region
      %s20 = ssub.s32 128, 128
      %21 = vsyncadd [#allocation3], %s20
      %s22 = sshll.u32 [#allocation2], 4
      %s23 = int_to_ptr.vmem [resolvable:$true] %s22
      %28 = dma.hbm_to_vmem [thread:$0]  %s0, 128, %s23, [#allocation3], 64, 64, 4
    $region5: #{tpu_custom_call.1} parent=1 // pred_fallthru
      _
    // Predicated region
    $region6: #{tpu_custom_call.1} parent=1 // pred_check
      _
    $region7: #{tpu_custom_call.1} parent=1 // pred_check_branch
      %30 = sbr.rel (0) target = $region9
    $region8: #{tpu_custom_call.1} parent=1 // pred_region
      %s32 = ssub.s32 1024, 1024
      %33 = vsyncadd [#allocation6], %s32
      %s34 = sshll.u32 [#allocation5], 4
      %s35 = int_to_ptr.vmem [resolvable:$true] %s34
      %40 = dma.hbm_to_vmem [thread:$0]  %s1, 1024, %s35, [#allocation6], 64, 64, 4
    $region9: #{tpu_custom_call.1} parent=1 // pred_fallthru
      _
    // Predicated region
    $region10: #{tpu_custom_call.1} parent=1 // pred_check
      _
    $region11: #{tpu_custom_call.1} parent=1 // pred_check_branch
      %42 = sbr.rel (0) target = $region13
    $region12: #{tpu_custom_call.1} parent=1 // pred_region
      %s44 = ssub.s32 1024, 1024
      %45 = vsyncadd [#allocation6], %s44
      %s46 = sshll.u32 [#allocation7], 4
      %s47 = int_to_ptr.vmem [resolvable:$true] %s46
      %52 = dma.hbm_to_vmem [thread:$0]  %s2, 1024, %s47, [#allocation6], 64, 64, 4
    $region13: #{tpu_custom_call.1} parent=1 // pred_fallthru
      _
    // Predicated region
    $region14: #{tpu_custom_call.1} parent=1 // pred_check
      _
    $region15: #{tpu_custom_call.1} parent=1 // pred_check_branch
      %54 = sbr.rel (0) target = $region17
    $region16: #{tpu_custom_call.1} parent=1 // pred_region
      %s56 = ssub.s32 1024, 1024
      %57 = vsyncadd [#allocation9], %s56
      %s58 = sshll.u32 [#allocation8], 4
      %s59 = int_to_ptr.vmem [resolvable:$true] %s58
      %64 = dma.hbm_to_vmem [thread:$0]  %s3, 1024, %s59, [#allocation9], 64, 64, 4
    $region17: #{tpu_custom_call.1} parent=1 // pred_fallthru
      _
    // Predicated region
    $region18: #{tpu_custom_call.1} parent=1 // pred_check
      _
    $region19: #{tpu_custom_call.1} parent=1 // pred_check_branch
      %66 = sbr.rel (0) target = $region21
    $region20: #{tpu_custom_call.1} parent=1 // pred_region
      %67 = dma.done [#allocation3], 128
    $region21: #{tpu_custom_call.1} parent=1 // pred_fallthru
      _
    // Predicated region
    $region22: #{tpu_custom_call.1} parent=1 // pred_check
      _
    $region23: #{tpu_custom_call.1} parent=1 // pred_check_branch
      %69 = sbr.rel (0) target = $region25
    $region24: #{tpu_custom_call.1} parent=1 // pred_region
      %70 = dma.done [#allocation6], 1024
    $region25: #{tpu_custom_call.1} parent=1 // pred_fallthru
      _
    // Predicated region
    $region26: #{tpu_custom_call.1} parent=1 // pred_check
      _
    $region27: #{tpu_custom_call.1} parent=1 // pred_check_branch
      %72 = sbr.rel (0) target = $region29
    $region28: #{tpu_custom_call.1} parent=1 // pred_region
      %73 = dma.done [#allocation6], 1024
    $region29: #{tpu_custom_call.1} parent=1 // pred_fallthru
      _
    // Predicated region
    $region30: #{tpu_custom_call.1} parent=1 // pred_check
      _
    $region31: #{tpu_custom_call.1} parent=1 // pred_check_branch
      %75 = sbr.rel (0) target = $region33
    $region32: #{tpu_custom_call.1} parent=1 // pred_region
      %76 = dma.done [#allocation9], 1024
    $region33: #{tpu_custom_call.1} parent=1 // pred_fallthru
      _
    %v78 = vld [vmem:[#allocation2] sm:$0xf]
    %v79 = vld [vmem:[#allocation2 + $0x4] sm:$0xf]
    %v80 = vld [vmem:[#allocation5] sm:$0xf]
    %v81 = vld [vmem:[#allocation5 + $0x4] sm:$0xf]
    %v82 = vld [vmem:[#allocation5 + $0x8] sm:$0xf]
    %v83 = vld [vmem:[#allocation5 + $0xc] sm:$0xf]
    %v84 = vld [vmem:[#allocation5 + $0x10] sm:$0xf]
    %v85 = vld [vmem:[#allocation5 + $0x14] sm:$0xf]
    %v86 = vld [vmem:[#allocation5 + $0x18] sm:$0xf]
    %v87 = vld [vmem:[#allocation5 + $0x1c] sm:$0xf]
    %v88 = vld [vmem:[#allocation5 + $0x20] sm:$0xf]
    %v89 = vld [vmem:[#allocation5 + $0x24] sm:$0xf]
    %v90 = vld [vmem:[#allocation5 + $0x28] sm:$0xf]
    %v91 = vld [vmem:[#allocation5 + $0x2c] sm:$0xf]
    %v92 = vld [vmem:[#allocation5 + $0x30] sm:$0xf]
    %v93 = vld [vmem:[#allocation5 + $0x34] sm:$0xf]
    %v94 = vld [vmem:[#allocation5 + $0x38] sm:$0xf]
    %v95 = vld [vmem:[#allocation5 + $0x3c] sm:$0xf]
    %v98 = vunpack.c.l.b16 %v78
    %v99 = vunpack.c.l.b16 %v79
    %v100 = vpack.c.b16 %v99, %v98
    %v118 = vunpack.c.l.b16 %v80
    %v119 = vunpack.c.l.b16 %v81
    %v120 = vunpack.c.l.b16 %v82
    %v121 = vunpack.c.l.b16 %v83
    %v122 = vunpack.c.l.b16 %v84
    %v123 = vunpack.c.l.b16 %v85
    %v124 = vunpack.c.l.b16 %v86
    %v125 = vunpack.c.l.b16 %v87
    %v126 = vunpack.c.l.b16 %v88
    %v127 = vunpack.c.l.b16 %v89
    %v128 = vunpack.c.l.b16 %v90
    %v129 = vunpack.c.l.b16 %v91
    %v130 = vunpack.c.l.b16 %v92
    %v131 = vunpack.c.l.b16 %v93
    %v132 = vunpack.c.l.b16 %v94
    %v133 = vunpack.c.l.b16 %v95
    %v134 = vpack.c.b16 %v119, %v118
    %v135 = vpack.c.b16 %v121, %v120
    %v136 = vpack.c.b16 %v123, %v122
    %v137 = vpack.c.b16 %v125, %v124
    %v138 = vpack.c.b16 %v127, %v126
    %v139 = vpack.c.b16 %v129, %v128
    %v140 = vpack.c.b16 %v131, %v130
    %v141 = vpack.c.b16 %v133, %v132
    %150 = vmatprep.subr.bf16.mxu0 0
    %151 = vmatpush1.bf16.msra.mxu0 %v134
    %152 = vmatprep.subr.bf16.mxu0 0
    %153 = vmatpush1.bf16.msra.mxu0 %v135
    %154 = vmatprep.subr.bf16.mxu0 0
    %155 = vmatpush1.bf16.msra.mxu0 %v136
    %156 = vmatprep.subr.bf16.mxu0 0
    %157 = vmatpush1.bf16.msra.mxu0 %v137
    %158 = vmatprep.subr.bf16.mxu0 0
    %159 = vmatpush1.bf16.msra.mxu0 %v138
    %160 = vmatprep.subr.bf16.mxu0 0
    %161 = vmatpush1.bf16.msra.mxu0 %v139
    %162 = vmatprep.subr.bf16.mxu0 0
    %163 = vmatpush1.bf16.msra.mxu0 %v140
    %164 = vmatprep.subr.bf16.mxu0 0
    %165 = vmatpush1.bf16.msra.mxu0 %v141
    %166 = vmatprep.subr.bf16.mxu0 0
    %167 = vmatpush1.bf16.msra.mxu0 0
    %168 = vmatprep.subr.bf16.mxu0 0
    %169 = vmatpush1.bf16.msra.mxu0 0
    %170 = vmatprep.subr.bf16.mxu0 0
    %171 = vmatpush1.bf16.msra.mxu0 0
    %172 = vmatprep.subr.bf16.mxu0 0
    %173 = vmatpush1.bf16.msra.mxu0 0
    %174 = vmatprep.subr.bf16.mxu0 0
    %175 = vmatpush1.bf16.msra.mxu0 0
    %176 = vmatprep.subr.bf16.mxu0 0
    %177 = vmatpush1.bf16.msra.mxu0 0
    %178 = vmatprep.subr.bf16.mxu0 0
    %179 = vmatpush1.bf16.msra.mxu0 0
    %180 = vmatprep.subr.bf16.mxu0 0
    %181 = vmatpush1.bf16.msra.mxu0 0
    %182 = vmatprep.mubr.bf16.mxu0 0
    %183 = vmatmul.mubr.bf16.gmra.mrb[0].mxu0 %v100
    %v184 = vpop.f32.mrb[0].mxu0
    %v185 = vadd.f32 0.0, %v184
    %v186 = vpop.f32.mrb[0].mxu0
    %v187 = vpop.f32.mrb[0].mxu0
    %v188 = vadd.f32 0.0, %v187
    %v189 = vpop.f32.mrb[0].mxu0
    %190 = vdwg.mxu0
    %v191 = vmul.f32 %v185, 0.70710677
    %v192 = vmul.f32 %v188, 0.70710677
    %v193 = vld [vmem:[#allocation7] sm:$0xf]
    %v194 = vld [vmem:[#allocation7 + $0x4] sm:$0xf]
    %v195 = vld [vmem:[#allocation7 + $0x8] sm:$0xf]
    %v196 = vld [vmem:[#allocation7 + $0xc] sm:$0xf]
    %v197 = vld [vmem:[#allocation7 + $0x10] sm:$0xf]
    %v198 = vld [vmem:[#allocation7 + $0x14] sm:$0xf]
    %v199 = vld [vmem:[#allocation7 + $0x18] sm:$0xf]
    %v200 = vld [vmem:[#allocation7 + $0x1c] sm:$0xf]
    %v201 = vld [vmem:[#allocation7 + $0x20] sm:$0xf]
    %v202 = vld [vmem:[#allocation7 + $0x24] sm:$0xf]
    %v203 = vld [vmem:[#allocation7 + $0x28] sm:$0xf]
    %v204 = vld [vmem:[#allocation7 + $0x2c] sm:$0xf]
    %v205 = vld [vmem:[#allocation7 + $0x30] sm:$0xf]
    %v206 = vld [vmem:[#allocation7 + $0x34] sm:$0xf]
    %v207 = vld [vmem:[#allocation7 + $0x38] sm:$0xf]
    %v208 = vld [vmem:[#allocation7 + $0x3c] sm:$0xf]
    %v225 = vunpack.c.l.b16 %v193
    %v226 = vunpack.c.l.b16 %v194
    %v227 = vunpack.c.l.b16 %v195
    %v228 = vunpack.c.l.b16 %v196
    %v229 = vunpack.c.l.b16 %v197
    %v230 = vunpack.c.l.b16 %v198
    %v231 = vunpack.c.l.b16 %v199
    %v232 = vunpack.c.l.b16 %v200
    %v233 = vunpack.c.l.b16 %v201
    %v234 = vunpack.c.l.b16 %v202
    %v235 = vunpack.c.l.b16 %v203
    %v236 = vunpack.c.l.b16 %v204
    %v237 = vunpack.c.l.b16 %v205
    %v238 = vunpack.c.l.b16 %v206
    %v239 = vunpack.c.l.b16 %v207
    %v240 = vunpack.c.l.b16 %v208
    %v241 = vpack.c.b16 %v226, %v225
    %v242 = vpack.c.b16 %v228, %v227
    %v243 = vpack.c.b16 %v230, %v229
    %v244 = vpack.c.b16 %v232, %v231
    %v245 = vpack.c.b16 %v234, %v233
    %v246 = vpack.c.b16 %v236, %v235
    %v247 = vpack.c.b16 %v238, %v237
    %v248 = vpack.c.b16 %v240, %v239
    %257 = vmatprep.subr.bf16.mxu0 0
    %258 = vmatpush1.bf16.msra.mxu0 %v241
    %259 = vmatprep.subr.bf16.mxu0 0
    %260 = vmatpush1.bf16.msra.mxu0 %v242
    %261 = vmatprep.subr.bf16.mxu0 0
    %262 = vmatpush1.bf16.msra.mxu0 %v243
    %263 = vmatprep.subr.bf16.mxu0 0
    %264 = vmatpush1.bf16.msra.mxu0 %v244
    %265 = vmatprep.subr.bf16.mxu0 0
    %266 = vmatpush1.bf16.msra.mxu0 %v245
    %267 = vmatprep.subr.bf16.mxu0 0
    %268 = vmatpush1.bf16.msra.mxu0 %v246
    %269 = vmatprep.subr.bf16.mxu0 0
    %270 = vmatpush1.bf16.msra.mxu0 %v247
    %271 = vmatprep.subr.bf16.mxu0 0
    %272 = vmatpush1.bf16.msra.mxu0 %v248
    %273 = vmatprep.subr.bf16.mxu0 0
    %274 = vmatpush1.bf16.msra.mxu0 0
    %275 = vmatprep.subr.bf16.mxu0 0
    %276 = vmatpush1.bf16.msra.mxu0 0
    %277 = vmatprep.subr.bf16.mxu0 0
    %278 = vmatpush1.bf16.msra.mxu0 0
    %279 = vmatprep.subr.bf16.mxu0 0
    %280 = vmatpush1.bf16.msra.mxu0 0
    %281 = vmatprep.subr.bf16.mxu0 0
    %282 = vmatpush1.bf16.msra.mxu0 0
    %283 = vmatprep.subr.bf16.mxu0 0
    %284 = vmatpush1.bf16.msra.mxu0 0
    %285 = vmatprep.subr.bf16.mxu0 0
    %286 = vmatpush1.bf16.msra.mxu0 0
    %287 = vmatprep.subr.bf16.mxu0 0
    %288 = vmatpush1.bf16.msra.mxu0 0
    %289 = vmatprep.mubr.bf16.mxu0 0
    %290 = vmatmul.mubr.bf16.gmra.mrb[0].mxu0 %v100
    %v291 = vpop.f32.mrb[0].mxu0
    %v292 = vadd.f32 0.0, %v291
    %v293 = vpop.f32.mrb[0].mxu0
    %v294 = vpop.f32.mrb[0].mxu0
    %v295 = vadd.f32 0.0, %v294
    %v296 = vpop.f32.mrb[0].mxu0
    %297 = vdwg.mxu0
    %v298 = vld [vmem:[#allocation8] sm:$0xf]
    %v299 = vld [vmem:[#allocation8 + $0x4] sm:$0xf]
    %v300 = vld [vmem:[#allocation8 + $0x8] sm:$0xf]
    %v301 = vld [vmem:[#allocation8 + $0xc] sm:$0xf]
    %v302 = vld [vmem:[#allocation8 + $0x10] sm:$0xf]
    %v303 = vld [vmem:[#allocation8 + $0x14] sm:$0xf]
    %v304 = vld [vmem:[#allocation8 + $0x18] sm:$0xf]
    %v305 = vld [vmem:[#allocation8 + $0x1c] sm:$0xf]
    %v306 = vld [vmem:[#allocation8 + $0x20] sm:$0xf]
    %v307 = vld [vmem:[#allocation8 + $0x24] sm:$0xf]
    %v308 = vld [vmem:[#allocation8 + $0x28] sm:$0xf]
    %v309 = vld [vmem:[#allocation8 + $0x2c] sm:$0xf]
    %v310 = vld [vmem:[#allocation8 + $0x30] sm:$0xf]
    %v311 = vld [vmem:[#allocation8 + $0x34] sm:$0xf]
    %v312 = vld [vmem:[#allocation8 + $0x38] sm:$0xf]
    %v313 = vld [vmem:[#allocation8 + $0x3c] sm:$0xf]
    %v330 = vunpack.c.l.b16 %v298
    %v331 = vunpack.c.l.b16 %v299
    %v332 = vunpack.c.l.b16 %v300
    %v333 = vunpack.c.l.b16 %v301
    %v334 = vunpack.c.l.b16 %v302
    %v335 = vunpack.c.l.b16 %v303
    %v336 = vunpack.c.l.b16 %v304
    %v337 = vunpack.c.l.b16 %v305
    %v338 = vunpack.c.l.b16 %v306
    %v339 = vunpack.c.l.b16 %v307
    %v340 = vunpack.c.l.b16 %v308
    %v341 = vunpack.c.l.b16 %v309
    %v342 = vunpack.c.l.b16 %v310
    %v343 = vunpack.c.l.b16 %v311
    %v344 = vunpack.c.l.b16 %v312
    %v345 = vunpack.c.l.b16 %v313
    %v346 = vpack.c.b16 %v331, %v330
    %v347 = vpack.c.b16 %v333, %v332
    %v348 = vpack.c.b16 %v335, %v334
    %v349 = vpack.c.b16 %v337, %v336
    %v350 = vpack.c.b16 %v339, %v338
    %v351 = vpack.c.b16 %v341, %v340
    %v352 = vpack.c.b16 %v343, %v342
    %v353 = vpack.c.b16 %v345, %v344
    %362 = vmatprep.subr.bf16.mxu0 0
    %363 = vmatpush1.bf16.msra.mxu0 %v346
    %364 = vmatprep.subr.bf16.mxu0 0
    %365 = vmatpush1.bf16.msra.mxu0 %v347
    %366 = vmatprep.subr.bf16.mxu0 0
    %367 = vmatpush1.bf16.msra.mxu0 %v348
    %368 = vmatprep.subr.bf16.mxu0 0
    %369 = vmatpush1.bf16.msra.mxu0 %v349
    %370 = vmatprep.subr.bf16.mxu0 0
    %371 = vmatpush1.bf16.msra.mxu0 %v350
    %372 = vmatprep.subr.bf16.mxu0 0
    %373 = vmatpush1.bf16.msra.mxu0 %v351
    %374 = vmatprep.subr.bf16.mxu0 0
    %375 = vmatpush1.bf16.msra.mxu0 %v352
    %376 = vmatprep.subr.bf16.mxu0 0
    %377 = vmatpush1.bf16.msra.mxu0 %v353
    %378 = vmatprep.subr.bf16.mxu0 0
    %379 = vmatpush1.bf16.msra.mxu0 0
    %380 = vmatprep.subr.bf16.mxu0 0
    %381 = vmatpush1.bf16.msra.mxu0 0
    %382 = vmatprep.subr.bf16.mxu0 0
    %383 = vmatpush1.bf16.msra.mxu0 0
    %384 = vmatprep.subr.bf16.mxu0 0
    %385 = vmatpush1.bf16.msra.mxu0 0
    %386 = vmatprep.subr.bf16.mxu0 0
    %387 = vmatpush1.bf16.msra.mxu0 0
    %388 = vmatprep.subr.bf16.mxu0 0
    %389 = vmatpush1.bf16.msra.mxu0 0
    %390 = vmatprep.subr.bf16.mxu0 0
    %391 = vmatpush1.bf16.msra.mxu0 0
    %392 = vmatprep.subr.bf16.mxu0 0
    %393 = vmatpush1.bf16.msra.mxu0 0
    %394 = vmatprep.mubr.bf16.mxu0 0
    %395 = vmatmul.mubr.bf16.gmra.mrb[0].mxu0 %v100
    %v396 = vpop.f32.mrb[0].mxu0
    %v397 = vadd.f32 0.0, %v396
    %v398 = vpop.f32.mrb[0].mxu0
    %v399 = vpop.f32.mrb[0].mxu0
    %v400 = vadd.f32 0.0, %v399
    %v401 = vpop.f32.mrb[0].mxu0
    %402 = vdwg.mxu0
    %v403 = vlaneseq
    %v404 = vand.u32 %v403, 127
    %vm405 = vcmp.eq.s32.totalorder %v404, 2
    %v406 = vsel %vm405, 1.0, %v191
    %v407 = vsel %vm405, 1.0, %v192
    %s408 = smul.u32 0, 16
    %v409 = vlaneseq
    %v410 = vshrl.u32 %v409, 7
    %v411 = vadd.s32 %v410, 8
    %v412 = vstv %s408
    %v413 = vadd.s32 %v412, %v410
    %v414 = vadd.s32 %v412, %v411
    %vm415 = vcmp.ge.s32.totalorder %v413, 6
    %vm416 = vcmp.ge.s32.totalorder %v414, 6
    %vm417 = vmand %vm405, %vm415
    %vm418 = vmand %vm405, %vm416
    %v419 = vsel %vm417, -1e+30, %v292
    %v420 = vsel %vm418, -1e+30, %v295
    %v421 = vpack.c.bf16 %v407, %v406
    %v423 = vunpack.c.l.b16 %v421
    %v424 = vunpack.c.h.b16 %v421
    %v425 = vpack.c.b16 %v423, %v423
    %v426 = vpack.c.b16 %v424, %v424
    %429 = vst [vmem:[#allocation10] sm:$0xf] %v425
    %430 = vst [vmem:[#allocation10 + $0x4] sm:$0xf] %v426
    %v431 = vpack.c.bf16 %v420, %v419
    %v433 = vunpack.c.l.b16 %v431
    %v434 = vunpack.c.h.b16 %v431
    %v435 = vpack.c.b16 %v433, %v433
    %v436 = vpack.c.b16 %v434, %v434
    %439 = vst [vmem:[#allocation11] sm:$0xf] %v435
    %440 = vst [vmem:[#allocation11 + $0x4] sm:$0xf] %v436
    %v441 = vpack.c.bf16 %v400, %v397
    %v443 = vunpack.c.l.b16 %v441
    %v444 = vunpack.c.h.b16 %v441
    %v445 = vpack.c.b16 %v443, %v443
    %v446 = vpack.c.b16 %v444, %v444
    %449 = vst [vmem:[#allocation13] sm:$0xf] %v445
    %450 = vst [vmem:[#allocation13 + $0x4] sm:$0xf] %v446
    // Predicated region
    $region34: #{tpu_custom_call.1} parent=1 // pred_check
      _
    $region35: #{tpu_custom_call.1} parent=1 // pred_check_branch
      %452 = sbr.rel (0) target = $region37
    $region36: #{tpu_custom_call.1} parent=1 // pred_region
      %s454 = ssub.s32 128, 128
      %455 = vsyncadd [#allocation4], %s454
      %s456 = sshll.u32 [#allocation10], 4
      %s457 = int_to_ptr.vmem [resolvable:$true] %s456
      %462 = dma.vmem_to_hbm [thread:$0]  %s457, 128, %s4, [#allocation4], 64, 64, 4
    $region37: #{tpu_custom_call.1} parent=1 // pred_fallthru
      _
    // Predicated region
    $region38: #{tpu_custom_call.1} parent=1 // pred_check
      _
    $region39: #{tpu_custom_call.1} parent=1 // pred_check_branch
      %464 = sbr.rel (0) target = $region41
    $region40: #{tpu_custom_call.1} parent=1 // pred_region
      %s466 = ssub.s32 128, 128
      %467 = vsyncadd [#allocation12], %s466
      %s468 = sshll.u32 [#allocation11], 4
      %s469 = int_to_ptr.vmem [resolvable:$true] %s468
      %474 = dma.vmem_to_hbm [thread:$0]  %s469, 128, %s5, [#allocation12], 64, 64, 4
    $region41: #{tpu_custom_call.1} parent=1 // pred_fallthru
      _
    // Predicated region
    $region42: #{tpu_custom_call.1} parent=1 // pred_check
      _
    $region43: #{tpu_custom_call.1} parent=1 // pred_check_branch
      %476 = sbr.rel (0) target = $region45
    $region44: #{tpu_custom_call.1} parent=1 // pred_region
      %s478 = ssub.s32 128, 128
      %479 = vsyncadd [#allocation12], %s478
      %s480 = sshll.u32 [#allocation13], 4
      %s481 = int_to_ptr.vmem [resolvable:$true] %s480
      %486 = dma.vmem_to_hbm [thread:$0]  %s481, 128, %s6, [#allocation12], 64, 64, 4
    $region45: #{tpu_custom_call.1} parent=1 // pred_fallthru
      _
    // Predicated region
    $region46: #{tpu_custom_call.1} parent=1 // pred_check
      _
    $region47: #{tpu_custom_call.1} parent=1 // pred_check_branch
      %488 = sbr.rel (0) target = $region49
    $region48: #{tpu_custom_call.1} parent=1 // pred_region
      %489 = dma.done [#allocation4], 128
    $region49: #{tpu_custom_call.1} parent=1 // pred_fallthru
      _
    // Predicated region
    $region50: #{tpu_custom_call.1} parent=1 // pred_check
      _
    $region51: #{tpu_custom_call.1} parent=1 // pred_check_branch
      %491 = sbr.rel (0) target = $region53
    $region52: #{tpu_custom_call.1} parent=1 // pred_region
      %492 = dma.done [#allocation12], 128
    $region53: #{tpu_custom_call.1} parent=1 // pred_fallthru
      _
    // Predicated region
    $region54: #{tpu_custom_call.1} parent=1 // pred_check
      _
    $region55: #{tpu_custom_call.1} parent=1 // pred_check_branch
      %494 = sbr.rel (0) target = $region57
    $region56: #{tpu_custom_call.1} parent=1 // pred_region
      %495 = dma.done [#allocation12], 128
    $region57: #{tpu_custom_call.1} parent=1 // pred_fallthru
      _
    %496 = vsyncpa [#allocation3], 1
    %497 = vsyncpa [#allocation6], 1
    %498 = vsyncpa [#allocation9], 1
    %499 = vsyncpa [#allocation4], 1
    %500 = vsyncpa [#allocation12], 1

// kernel: tpu_custom_call.1
$region0: #{tpu_custom_call.1}
  #allocation0 [shape = 'u32[]', space=smem, size = 0x4, offset = 0x4, fixed_abs, tag = 'smem constant byte address 0x4 - core index']
  #allocation1 [shape = 'u32[144,128]{1,0:T(1,128)}', space=vmem, size = 0x12000, scoped, tag = 'internal scratch']
  %s0 = inlined_call_operand.hbm [shape: bf16[16,128], index: 0, kind: input, shape index: {}]
  %s1 = inlined_call_operand.hbm [shape: bf16[128,128], index: 1, kind: input, shape index: {}]
  %s2 = inlined_call_operand.hbm [shape: bf16[128,128], index: 2, kind: input, shape index: {}]
  %s3 = inlined_call_operand.hbm [shape: bf16[128,128], index: 3, kind: input, shape index: {}]
  %s4 = inlined_call_operand.hbm [shape: bf16[16,128], index: 4, kind: output, shape index: {0}]
  %s5 = inlined_call_operand.hbm [shape: bf16[16,128], index: 5, kind: output, shape index: {1}]
  %s6 = inlined_call_operand.hbm [shape: bf16[16,128], index: 6, kind: output, shape index: {2}]
  %7 = xla_tuple %s4, %s5, %s6
  %s8 = sld [smem:[#allocation0]]
  $region58: #{tpu_custom_call.1} parent=0
    _
  %s10 = ssub.s32 1, %s8
  %s11 = scalar_select 0, %s10, %s8
  $region1: #{tpu_custom_call.1} parent=0
    #allocation2 [shape = 'u8[4096]{0}', space=vmem, size = 0x1000, scoped, tag = 'input window, operand 0, single buffered']
    #allocation3 [shape = 's32[1]{0}', space=sflag, size = 0x4, scoped, tag = 'scoped memory for tpu_custom_call.1']
    #allocation4 [shape = 's32[1]{0}', space=sflag, size = 0x4, scoped, tag = 'scoped memory for tpu_custom_call.1']
    #allocation5 [shape = 'u8[32768]{0}', space=vmem, size = 0x8000, scoped, tag = 'input window, operand 1, single buffered']
    #allocation6 [shape = 's32[1]{0}', space=sflag, size = 0x4, scoped, tag = 'scoped memory for tpu_custom_call.1']
    #allocation7 [shape = 'u8[32768]{0}', space=vmem, size = 0x8000, scoped, tag = 'input window, operand 2, single buffered']
    #allocation8 [shape = 'u8[32768]{0}', space=vmem, size = 0x8000, scoped, tag = 'input window, operand 3, single buffered']
    #allocation9 [shape = 's32[1]{0}', space=sflag, size = 0x4, scoped, tag = 'scoped memory for tpu_custom_call.1']
    #allocation10 [shape = 'u8[4096]{0}', space=vmem, size = 0x1000, scoped, tag = 'output window, operand 0, single buffered']
    #allocation11 [shape = 'u8[4096]{0}', space=vmem, size = 0x1000, scoped, tag = 'output window, operand 1, single buffered']
    #allocation12 [shape = 's32[1]{0}', space=sflag, size = 0x4, scoped, tag = 'scoped memory for tpu_custom_call.1']
    #allocation13 [shape = 'u8[4096]{0}', space=vmem, size = 0x1000, scoped, tag = 'output window, operand 2, single buffered']
    %12 = vsyncpa [#allocation3], 0
    %13 = vsyncpa [#allocation6], 0
    %14 = vsyncpa [#allocation9], 0
    %15 = vsyncpa [#allocation4], 0
    %16 = vsyncpa [#allocation12], 0
    // Predicated region
    $region2: #{tpu_custom_call.1} parent=1 // pred_check
      _
    $region3: #{tpu_custom_call.1} parent=1 // pred_check_branch
      %18 = sbr.rel (0) target = $region5
    $region4: #{tpu_custom_call.1} parent=1 // pred_region
      %s20 = ssub.s32 128, 128
      %21 = vsyncadd [#allocation3], %s20
      %s22 = sshll.u32 [#allocation2], 4
      %s23 = int_to_ptr.vmem [resolvable:$true] %s22
      %28 = dma.hbm_to_vmem [thread:$0]  %s0, 128, %s23, [#allocation3], 64, 64, 4
    $region5: #{tpu_custom_call.1} parent=1 // pred_fallthru
      _
    // Predicated region
    $region6: #{tpu_custom_call.1} parent=1 // pred_check
      _
    $region7: #{tpu_custom_call.1} parent=1 // pred_check_branch
      %30 = sbr.rel (0) target = $region9
    $region8: #{tpu_custom_call.1} parent=1 // pred_region
      %s32 = ssub.s32 1024, 1024
      %33 = vsyncadd [#allocation6], %s32
      %s34 = sshll.u32 [#allocation5], 4
      %s35 = int_to_ptr.vmem [resolvable:$true] %s34
      %40 = dma.hbm_to_vmem [thread:$0]  %s1, 1024, %s35, [#allocation6], 64, 64, 4
    $region9: #{tpu_custom_call.1} parent=1 // pred_fallthru
      _
    // Predicated region
    $region10: #{tpu_custom_call.1} parent=1 // pred_check
      _
    $region11: #{tpu_custom_call.1} parent=1 // pred_check_branch
      %42 = sbr.rel (0) target = $region13
    $region12: #{tpu_custom_call.1} parent=1 // pred_region
      %s44 = ssub.s32 1024, 1024
      %45 = vsyncadd [#allocation6], %s44
      %s46 = sshll.u32 [#allocation7], 4
      %s47 = int_to_ptr.vmem [resolvable:$true] %s46
      %52 = dma.hbm_to_vmem [thread:$0]  %s2, 1024, %s47, [#allocation6], 64, 64, 4
    $region13: #{tpu_custom_call.1} parent=1 // pred_fallthru
      _
    // Predicated region
    $region14: #{tpu_custom_call.1} parent=1 // pred_check
      _
    $region15: #{tpu_custom_call.1} parent=1 // pred_check_branch
      %54 = sbr.rel (0) target = $region17
    $region16: #{tpu_custom_call.1} parent=1 // pred_region
      %s56 = ssub.s32 1024, 1024
      %57 = vsyncadd [#allocation9], %s56
      %s58 = sshll.u32 [#allocation8], 4
      %s59 = int_to_ptr.vmem [resolvable:$true] %s58
      %64 = dma.hbm_to_vmem [thread:$0]  %s3, 1024, %s59, [#allocation9], 64, 64, 4
    $region17: #{tpu_custom_call.1} parent=1 // pred_fallthru
      _
    // Predicated region
    $region18: #{tpu_custom_call.1} parent=1 // pred_check
      _
    $region19: #{tpu_custom_call.1} parent=1 // pred_check_branch
      %66 = sbr.rel (0) target = $region21
    $region20: #{tpu_custom_call.1} parent=1 // pred_region
      %67 = dma.done [#allocation3], 128
    $region21: #{tpu_custom_call.1} parent=1 // pred_fallthru
      _
    // Predicated region
    $region22: #{tpu_custom_call.1} parent=1 // pred_check
      _
    $region23: #{tpu_custom_call.1} parent=1 // pred_check_branch
      %69 = sbr.rel (0) target = $region25
    $region24: #{tpu_custom_call.1} parent=1 // pred_region
      %70 = dma.done [#allocation6], 1024
    $region25: #{tpu_custom_call.1} parent=1 // pred_fallthru
      _
    // Predicated region
    $region26: #{tpu_custom_call.1} parent=1 // pred_check
      _
    $region27: #{tpu_custom_call.1} parent=1 // pred_check_branch
      %72 = sbr.rel (0) target = $region29
    $region28: #{tpu_custom_call.1} parent=1 // pred_region
      %73 = dma.done [#allocation6], 1024
    $region29: #{tpu_custom_call.1} parent=1 // pred_fallthru
      _
    // Predicated region
    $region30: #{tpu_custom_call.1} parent=1 // pred_check
      _
    $region31: #{tpu_custom_call.1} parent=1 // pred_check_branch
      %75 = sbr.rel (0) target = $region33
    $region32: #{tpu_custom_call.1} parent=1 // pred_region
      %76 = dma.done [#allocation9], 1024
    $region33: #{tpu_custom_call.1} parent=1 // pred_fallthru
      _
    %v78 = vld [vmem:[#allocation2] sm:$0xf]
    %v79 = vld [vmem:[#allocation2 + $0x4] sm:$0xf]
    %v80 = vld [vmem:[#allocation5] sm:$0xf]
    %v81 = vld [vmem:[#allocation5 + $0x4] sm:$0xf]
    %v82 = vld [vmem:[#allocation5 + $0x8] sm:$0xf]
    %v83 = vld [vmem:[#allocation5 + $0xc] sm:$0xf]
    %v84 = vld [vmem:[#allocation5 + $0x10] sm:$0xf]
    %v85 = vld [vmem:[#allocation5 + $0x14] sm:$0xf]
    %v86 = vld [vmem:[#allocation5 + $0x18] sm:$0xf]
    %v87 = vld [vmem:[#allocation5 + $0x1c] sm:$0xf]
    %v88 = vld [vmem:[#allocation5 + $0x20] sm:$0xf]
    %v89 = vld [vmem:[#allocation5 + $0x24] sm:$0xf]
    %v90 = vld [vmem:[#allocation5 + $0x28] sm:$0xf]
    %v91 = vld [vmem:[#allocation5 + $0x2c] sm:$0xf]
    %v92 = vld [vmem:[#allocation5 + $0x30] sm:$0xf]
    %v93 = vld [vmem:[#allocation5 + $0x34] sm:$0xf]
    %v94 = vld [vmem:[#allocation5 + $0x38] sm:$0xf]
    %v95 = vld [vmem:[#allocation5 + $0x3c] sm:$0xf]
    %v98 = vunpack.c.l.b16 %v78
    %v99 = vunpack.c.l.b16 %v79
    %v100 = vpack.c.b16 %v99, %v98
    %v118 = vunpack.c.l.b16 %v80
    %v119 = vunpack.c.l.b16 %v81
    %v120 = vunpack.c.l.b16 %v82
    %v121 = vunpack.c.l.b16 %v83
    %v122 = vunpack.c.l.b16 %v84
    %v123 = vunpack.c.l.b16 %v85
    %v124 = vunpack.c.l.b16 %v86
    %v125 = vunpack.c.l.b16 %v87
    %v126 = vunpack.c.l.b16 %v88
    %v127 = vunpack.c.l.b16 %v89
    %v128 = vunpack.c.l.b16 %v90
    %v129 = vunpack.c.l.b16 %v91
    %v130 = vunpack.c.l.b16 %v92
    %v131 = vunpack.c.l.b16 %v93
    %v132 = vunpack.c.l.b16 %v94
    %v133 = vunpack.c.l.b16 %v95
    %v134 = vpack.c.b16 %v119, %v118
    %v135 = vpack.c.b16 %v121, %v120
    %v136 = vpack.c.b16 %v123, %v122
    %v137 = vpack.c.b16 %v125, %v124
    %v138 = vpack.c.b16 %v127, %v126
    %v139 = vpack.c.b16 %v129, %v128
    %v140 = vpack.c.b16 %v131, %v130
    %v141 = vpack.c.b16 %v133, %v132
    %150 = vmatprep.subr.bf16.mxu0 0
    %151 = vmatpush1.bf16.msra.mxu0 %v134
    %152 = vmatprep.subr.bf16.mxu0 0
    %153 = vmatpush1.bf16.msra.mxu0 %v135
    %154 = vmatprep.subr.bf16.mxu0 0
    %155 = vmatpush1.bf16.msra.mxu0 %v136
    %156 = vmatprep.subr.bf16.mxu0 0
    %157 = vmatpush1.bf16.msra.mxu0 %v137
    %158 = vmatprep.subr.bf16.mxu0 0
    %159 = vmatpush1.bf16.msra.mxu0 %v138
    %160 = vmatprep.subr.bf16.mxu0 0
    %161 = vmatpush1.bf16.msra.mxu0 %v139
    %162 = vmatprep.subr.bf16.mxu0 0
    %163 = vmatpush1.bf16.msra.mxu0 %v140
    %164 = vmatprep.subr.bf16.mxu0 0
    %165 = vmatpush1.bf16.msra.mxu0 %v141
    %166 = vmatprep.subr.bf16.mxu0 0
    %167 = vmatpush1.bf16.msra.mxu0 0
    %168 = vmatprep.subr.bf16.mxu0 0
    %169 = vmatpush1.bf16.msra.mxu0 0
    %170 = vmatprep.subr.bf16.mxu0 0
    %171 = vmatpush1.bf16.msra.mxu0 0
    %172 = vmatprep.subr.bf16.mxu0 0
    %173 = vmatpush1.bf16.msra.mxu0 0
    %174 = vmatprep.subr.bf16.mxu0 0
    %175 = vmatpush1.bf16.msra.mxu0 0
    %176 = vmatprep.subr.bf16.mxu0 0
    %177 = vmatpush1.bf16.msra.mxu0 0
    %178 = vmatprep.subr.bf16.mxu0 0
    %179 = vmatpush1.bf16.msra.mxu0 0
    %180 = vmatprep.subr.bf16.mxu0 0
    %181 = vmatpush1.bf16.msra.mxu0 0
    %182 = vmatprep.mubr.bf16.mxu0 0
    %183 = vmatmul.mubr.bf16.gmra.mrb[0].mxu0 %v100
    %v184 = vpop.f32.mrb[0].mxu0
    %v185 = vadd.f32 0.0, %v184
    %v186 = vpop.f32.mrb[0].mxu0
    %v187 = vpop.f32.mrb[0].mxu0
    %v188 = vadd.f32 0.0, %v187
    %v189 = vpop.f32.mrb[0].mxu0
    %190 = vdwg.mxu0
    %v191 = vmul.f32 %v185, 0.70710677
    %v192 = vmul.f32 %v188, 0.70710677
    %v193 = vld [vmem:[#allocation7] sm:$0xf]
    %v194 = vld [vmem:[#allocation7 + $0x4] sm:$0xf]
    %v195 = vld [vmem:[#allocation7 + $0x8] sm:$0xf]
    %v196 = vld [vmem:[#allocation7 + $0xc] sm:$0xf]
    %v197 = vld [vmem:[#allocation7 + $0x10] sm:$0xf]
    %v198 = vld [vmem:[#allocation7 + $0x14] sm:$0xf]
    %v199 = vld [vmem:[#allocation7 + $0x18] sm:$0xf]
    %v200 = vld [vmem:[#allocation7 + $0x1c] sm:$0xf]
    %v201 = vld [vmem:[#allocation7 + $0x20] sm:$0xf]
    %v202 = vld [vmem:[#allocation7 + $0x24] sm:$0xf]
    %v203 = vld [vmem:[#allocation7 + $0x28] sm:$0xf]
    %v204 = vld [vmem:[#allocation7 + $0x2c] sm:$0xf]
    %v205 = vld [vmem:[#allocation7 + $0x30] sm:$0xf]
    %v206 = vld [vmem:[#allocation7 + $0x34] sm:$0xf]
    %v207 = vld [vmem:[#allocation7 + $0x38] sm:$0xf]
    %v208 = vld [vmem:[#allocation7 + $0x3c] sm:$0xf]
    %v225 = vunpack.c.l.b16 %v193
    %v226 = vunpack.c.l.b16 %v194
    %v227 = vunpack.c.l.b16 %v195
    %v228 = vunpack.c.l.b16 %v196
    %v229 = vunpack.c.l.b16 %v197
    %v230 = vunpack.c.l.b16 %v198
    %v231 = vunpack.c.l.b16 %v199
    %v232 = vunpack.c.l.b16 %v200
    %v233 = vunpack.c.l.b16 %v201
    %v234 = vunpack.c.l.b16 %v202
    %v235 = vunpack.c.l.b16 %v203
    %v236 = vunpack.c.l.b16 %v204
    %v237 = vunpack.c.l.b16 %v205
    %v238 = vunpack.c.l.b16 %v206
    %v239 = vunpack.c.l.b16 %v207
    %v240 = vunpack.c.l.b16 %v208
    %v241 = vpack.c.b16 %v226, %v225
    %v242 = vpack.c.b16 %v228, %v227
    %v243 = vpack.c.b16 %v230, %v229
    %v244 = vpack.c.b16 %v232, %v231
    %v245 = vpack.c.b16 %v234, %v233
    %v246 = vpack.c.b16 %v236, %v235
    %v247 = vpack.c.b16 %v238, %v237
    %v248 = vpack.c.b16 %v240, %v239
    %257 = vmatprep.subr.bf16.mxu0 0
    %258 = vmatpush1.bf16.msra.mxu0 %v241
    %259 = vmatprep.subr.bf16.mxu0 0
    %260 = vmatpush1.bf16.msra.mxu0 %v242
    %261 = vmatprep.subr.bf16.mxu0 0
    %262 = vmatpush1.bf16.msra.mxu0 %v243
    %263 = vmatprep.subr.bf16.mxu0 0
    %264 = vmatpush1.bf16.msra.mxu0 %v244
    %265 = vmatprep.subr.bf16.mxu0 0
    %266 = vmatpush1.bf16.msra.mxu0 %v245
    %267 = vmatprep.subr.bf16.mxu0 0
    %268 = vmatpush1.bf16.msra.mxu0 %v246
    %269 = vmatprep.subr.bf16.mxu0 0
    %270 = vmatpush1.bf16.msra.mxu0 %v247
    %271 = vmatprep.subr.bf16.mxu0 0
    %272 = vmatpush1.bf16.msra.mxu0 %v248
    %273 = vmatprep.subr.bf16.mxu0 0
    %274 = vmatpush1.bf16.msra.mxu0 0
    %275 = vmatprep.subr.bf16.mxu0 0
    %276 = vmatpush1.bf16.msra.mxu0 0
    %277 = vmatprep.subr.bf16.mxu0 0
    %278 = vmatpush1.bf16.msra.mxu0 0
    %279 = vmatprep.subr.bf16.mxu0 0
    %280 = vmatpush1.bf16.msra.mxu0 0
    %281 = vmatprep.subr.bf16.mxu0 0
    %282 = vmatpush1.bf16.msra.mxu0 0
    %283 = vmatprep.subr.bf16.mxu0 0
    %284 = vmatpush1.bf16.msra.mxu0 0
    %285 = vmatprep.subr.bf16.mxu0 0
    %286 = vmatpush1.bf16.msra.mxu0 0
    %287 = vmatprep.subr.bf16.mxu0 0
    %288 = vmatpush1.bf16.msra.mxu0 0
    %289 = vmatprep.mubr.bf16.mxu0 0
    %290 = vmatmul.mubr.bf16.gmra.mrb[0].mxu0 %v100
    %v291 = vpop.f32.mrb[0].mxu0
    %v292 = vadd.f32 0.0, %v291
    %v293 = vpop.f32.mrb[0].mxu0
    %v294 = vpop.f32.mrb[0].mxu0
    %v295 = vadd.f32 0.0, %v294
    %v296 = vpop.f32.mrb[0].mxu0
    %297 = vdwg.mxu0
    %v298 = vld [vmem:[#allocation8] sm:$0xf]
    %v299 = vld [vmem:[#allocation8 + $0x4] sm:$0xf]
    %v300 = vld [vmem:[#allocation8 + $0x8] sm:$0xf]
    %v301 = vld [vmem:[#allocation8 + $0xc] sm:$0xf]
    %v302 = vld [vmem:[#allocation8 + $0x10] sm:$0xf]
    %v303 = vld [vmem:[#allocation8 + $0x14] sm:$0xf]
    %v304 = vld [vmem:[#allocation8 + $0x18] sm:$0xf]
    %v305 = vld [vmem:[#allocation8 + $0x1c] sm:$0xf]
    %v306 = vld [vmem:[#allocation8 + $0x20] sm:$0xf]
    %v307 = vld [vmem:[#allocation8 + $0x24] sm:$0xf]
    %v308 = vld [vmem:[#allocation8 + $0x28] sm:$0xf]
    %v309 = vld [vmem:[#allocation8 + $0x2c] sm:$0xf]
    %v310 = vld [vmem:[#allocation8 + $0x30] sm:$0xf]
    %v311 = vld [vmem:[#allocation8 + $0x34] sm:$0xf]
    %v312 = vld [vmem:[#allocation8 + $0x38] sm:$0xf]
    %v313 = vld [vmem:[#allocation8 + $0x3c] sm:$0xf]
    %v330 = vunpack.c.l.b16 %v298
    %v331 = vunpack.c.l.b16 %v299
    %v332 = vunpack.c.l.b16 %v300
    %v333 = vunpack.c.l.b16 %v301
    %v334 = vunpack.c.l.b16 %v302
    %v335 = vunpack.c.l.b16 %v303
    %v336 = vunpack.c.l.b16 %v304
    %v337 = vunpack.c.l.b16 %v305
    %v338 = vunpack.c.l.b16 %v306
    %v339 = vunpack.c.l.b16 %v307
    %v340 = vunpack.c.l.b16 %v308
    %v341 = vunpack.c.l.b16 %v309
    %v342 = vunpack.c.l.b16 %v310
    %v343 = vunpack.c.l.b16 %v311
    %v344 = vunpack.c.l.b16 %v312
    %v345 = vunpack.c.l.b16 %v313
    %v346 = vpack.c.b16 %v331, %v330
    %v347 = vpack.c.b16 %v333, %v332
    %v348 = vpack.c.b16 %v335, %v334
    %v349 = vpack.c.b16 %v337, %v336
    %v350 = vpack.c.b16 %v339, %v338
    %v351 = vpack.c.b16 %v341, %v340
    %v352 = vpack.c.b16 %v343, %v342
    %v353 = vpack.c.b16 %v345, %v344
    %362 = vmatprep.subr.bf16.mxu0 0
    %363 = vmatpush1.bf16.msra.mxu0 %v346
    %364 = vmatprep.subr.bf16.mxu0 0
    %365 = vmatpush1.bf16.msra.mxu0 %v347
    %366 = vmatprep.subr.bf16.mxu0 0
    %367 = vmatpush1.bf16.msra.mxu0 %v348
    %368 = vmatprep.subr.bf16.mxu0 0
    %369 = vmatpush1.bf16.msra.mxu0 %v349
    %370 = vmatprep.subr.bf16.mxu0 0
    %371 = vmatpush1.bf16.msra.mxu0 %v350
    %372 = vmatprep.subr.bf16.mxu0 0
    %373 = vmatpush1.bf16.msra.mxu0 %v351
    %374 = vmatprep.subr.bf16.mxu0 0
    %375 = vmatpush1.bf16.msra.mxu0 %v352
    %376 = vmatprep.subr.bf16.mxu0 0
    %377 = vmatpush1.bf16.msra.mxu0 %v353
    %378 = vmatprep.subr.bf16.mxu0 0
    %379 = vmatpush1.bf16.msra.mxu0 0
    %380 = vmatprep.subr.bf16.mxu0 0
    %381 = vmatpush1.bf16.msra.mxu0 0
    %382 = vmatprep.subr.bf16.mxu0 0
    %383 = vmatpush1.bf16.msra.mxu0 0
    %384 = vmatprep.subr.bf16.mxu0 0
    %385 = vmatpush1.bf16.msra.mxu0 0
    %386 = vmatprep.subr.bf16.mxu0 0
    %387 = vmatpush1.bf16.msra.mxu0 0
    %388 = vmatprep.subr.bf16.mxu0 0
    %389 = vmatpush1.bf16.msra.mxu0 0
    %390 = vmatprep.subr.bf16.mxu0 0
    %391 = vmatpush1.bf16.msra.mxu0 0
    %392 = vmatprep.subr.bf16.mxu0 0
    %393 = vmatpush1.bf16.msra.mxu0 0
    %394 = vmatprep.mubr.bf16.mxu0 0
    %395 = vmatmul.mubr.bf16.gmra.mrb[0].mxu0 %v100
    %v396 = vpop.f32.mrb[0].mxu0
    %v397 = vadd.f32 0.0, %v396
    %v398 = vpop.f32.mrb[0].mxu0
    %v399 = vpop.f32.mrb[0].mxu0
    %v400 = vadd.f32 0.0, %v399
    %v401 = vpop.f32.mrb[0].mxu0
    %402 = vdwg.mxu0
    %v403 = vlaneseq
    %v404 = vand.u32 %v403, 127
    %vm405 = vcmp.eq.s32.totalorder %v404, 2
    %v406 = vsel %vm405, 1.0, %v191
    %v407 = vsel %vm405, 1.0, %v192
    %s408 = smul.u32 0, 16
    %v409 = vlaneseq
    %v410 = vshrl.u32 %v409, 7
    %v411 = vadd.s32 %v410, 8
    %v412 = vstv %s408
    %v413 = vadd.s32 %v412, %v410
    %v414 = vadd.s32 %v412, %v411
    %vm415 = vcmp.ge.s32.totalorder %v413, 6
    %vm416 = vcmp.ge.s32.totalorder %v414, 6
    %vm417 = vmand %vm405, %vm415
    %vm418 = vmand %vm405, %vm416
    %v419 = vsel %vm417, -1e+30, %v292
    %v420 = vsel %vm418, -1e+30, %v295
    %v421 = vpack.c.bf16 %v407, %v406
    %v423 = vunpack.c.l.b16 %v421
    %v424 = vunpack.c.h.b16 %v421
    %v425 = vpack.c.b16 %v423, %v423
    %v426 = vpack.c.b16 %v424, %v424
    %429 = vst [vmem:[#allocation10] sm:$0xf] %v425
    %430 = vst [vmem:[#allocation10 + $0x4] sm:$0xf] %v426
    %v431 = vpack.c.bf16 %v420, %v419
    %v433 = vunpack.c.l.b16 %v431
    %v434 = vunpack.c.h.b16 %v431
    %v435 = vpack.c.b16 %v433, %v433
    %v436 = vpack.c.b16 %v434, %v434
    %439 = vst [vmem:[#allocation11] sm:$0xf] %v435
    %440 = vst [vmem:[#allocation11 + $0x4] sm:$0xf] %v436
    %v441 = vpack.c.bf16 %v400, %v397
    %v443 = vunpack.c.l.b16 %v441
    %v444 = vunpack.c.h.b16 %v441
    %v445 = vpack.c.b16 %v443, %v443
    %v446 = vpack.c.b16 %v444, %v444
    %449 = vst [vmem:[#allocation13] sm:$0xf] %v445
    %450 = vst [vmem:[#allocation13 + $0x4] sm:$0xf] %v446
    // Predicated region
    $region34: #{tpu_custom_call.1} parent=1 // pred_check
      _
    $region35: #{tpu_custom_call.1} parent=1 // pred_check_branch
      %452 = sbr.rel (0) target = $region37
    $region36: #{tpu_custom_call.1} parent=1 // pred_region
      %s454 = ssub.s32 128, 128
      %455 = vsyncadd [#allocation4], %s454
      %s456 = sshll.u32 [#allocation10], 4
      %s457 = int_to_ptr.vmem [resolvable:$true] %s456
      %462 = dma.vmem_to_hbm [thread:$0]  %s457, 128, %s4, [#allocation4], 64, 64, 4
    $region37: #{tpu_custom_call.1} parent=1 // pred_fallthru
      _
    // Predicated region
    $region38: #{tpu_custom_call.1} parent=1 // pred_check
      _
    $region39: #{tpu_custom_call.1} parent=1 // pred_check_branch
      %464 = sbr.rel (0) target = $region41
    $region40: #{tpu_custom_call.1} parent=1 // pred_region
      %s466 = ssub.s32 128, 128
      %467 = vsyncadd [#allocation12], %s466
      %s468 = sshll.u32 [#allocation11], 4
      %s469 = int_to_ptr.vmem [resolvable:$true] %s468
      %474 = dma.vmem_to_hbm [thread:$0]  %s469, 128, %s5, [#allocation12], 64, 64, 4
    $region41: #{tpu_custom_call.1} parent=1 // pred_fallthru
      _
    // Predicated region
    $region42: #{tpu_custom_call.1} parent=1 // pred_check
      _
    $region43: #{tpu_custom_call.1} parent=1 // pred_check_branch
      %476 = sbr.rel (0) target = $region45
    $region44: #{tpu_custom_call.1} parent=1 // pred_region
      %s478 = ssub.s32 128, 128
      %479 = vsyncadd [#allocation12], %s478
      %s480 = sshll.u32 [#allocation13], 4
      %s481 = int_to_ptr.vmem [resolvable:$true] %s480
      %486 = dma.vmem_to_hbm [thread:$0]  %s481, 128, %s6, [#allocation12], 64, 64, 4
    $region45: #{tpu_custom_call.1} parent=1 // pred_fallthru
      _
    // Predicated region
    $region46: #{tpu_custom_call.1} parent=1 // pred_check
      _
    $region47: #{tpu_custom_call.1} parent=1 // pred_check_branch
      %488 = sbr.rel (0) target = $region49
    $region48: #{tpu_custom_call.1} parent=1 // pred_region
      %489 = dma.done [#allocation4], 128
    $region49: #{tpu_custom_call.1} parent=1 // pred_fallthru
      _
    // Predicated region
    $region50: #{tpu_custom_call.1} parent=1 // pred_check
      _
    $region51: #{tpu_custom_call.1} parent=1 // pred_check_branch
      %491 = sbr.rel (0) target = $region53
    $region52: #{tpu_custom_call.1} parent=1 // pred_region
      %492 = dma.done [#allocation12], 128
    $region53: #{tpu_custom_call.1} parent=1 // pred_fallthru
      _
    // Predicated region
    $region54: #{tpu_custom_call.1} parent=1 // pred_check
      _
    $region55: #{tpu_custom_call.1} parent=1 // pred_check_branch
      %494 = sbr.rel (0) target = $region57
    $region56: #{tpu_custom_call.1} parent=1 // pred_region
      %495 = dma.done [#allocation12], 128
    $region57: #{tpu_custom_call.1} parent=1 // pred_fallthru
      _
    %496 = vsyncpa [#allocation3], 1
    %497 = vsyncpa [#allocation6], 1
    %498 = vsyncpa [#allocation9], 1
    %499 = vsyncpa [#allocation4], 1
    %500 = vsyncpa [#allocation12], 1

</llo_original>
